<compile_context>
chip_gen: v5e
topology: v5e:2x2
jax: 0.10.0
libtpu: 0.0.40
codegen_flags: <defaults>
</compile_context>

<pallas_src>
import functools

import jax
import jax.numpy as jnp
from jax.experimental import pallas as pl
from jax.experimental.pallas import tpu as pltpu

_EPS = 1e-5


def _down_kernel(p_ref, w_ref, o_ref, y_acc, sum_ref, sq_ref, *, tp, inv_p):
    # p_ref : (TP, F_pad)      bf16 patch tile
    # w_ref : (F_pad, C_pad)   bf16 weights (block constant across grid)
    # o_ref : (P_pad, C_pad)   f32 output block, resident across the P axis
    # y_acc : (P_pad, C_pad)   f32 scratch: full conv output for this image
    # sum_ref / sq_ref : (1, C_pad) f32 running per-channel sum / sum-of-squares
    j = pl.program_id(1)

    @pl.when(j == 0)
    def _():
        sum_ref[...] = jnp.zeros_like(sum_ref)
        sq_ref[...] = jnp.zeros_like(sq_ref)

    # Conv tile: bf16 MXU matmul with f32 accumulation.  No bias add: a
    # per-channel constant is cancelled exactly by InstanceNorm's mean subtract.
    y = jnp.dot(p_ref[...], w_ref[...], preferred_element_type=jnp.float32)

    row = pl.multiple_of(j * tp, tp)
    y_acc[pl.ds(row, tp), :] = y
    sum_ref[...] += jnp.sum(y, axis=0, keepdims=True)
    sq_ref[...] += jnp.sum(y * y, axis=0, keepdims=True)

    @pl.when(j == pl.num_programs(1) - 1)
    def _():
        mean = sum_ref[...] * inv_p                                   # (1, C)
        var = jnp.maximum(sq_ref[...] * inv_p - mean * mean, 0.0)     # biased
        inv_std = jax.lax.rsqrt(var + _EPS)
        o_ref[...] = jnp.maximum((y_acc[...] - mean) * inv_std,
                                 0.0).astype(o_ref.dtype)


def _round_up(v, m):
    return (v + m - 1) // m * m


def _im2col(x, kernel_size, stride, padding):
    """x: (N, Cin, H, W) -> (N, OH*OW, Cin*K*K) in PyTorch (ci, kh, kw) order."""
    # TODO(synk): build patch tiles in-kernel (pl.ANY HBM ref + manual strided
    # make_async_copy) to avoid the K*K im2col HBM blow-up; plain-JAX glue here.
    n, cin, h, w = x.shape
    k, s, p = kernel_size, stride, padding
    oh = (h + 2 * p - k) // s + 1
    ow = (w + 2 * p - k) // s + 1
    xp = jnp.pad(x, ((0, 0), (0, 0), (p, p), (p, p)))
    slabs = []
    for kh in range(k):
        for kw in range(k):
            slabs.append(xp[:, :, kh:kh + s * oh:s, kw:kw + s * ow:s])  # (N,Cin,OH,OW)
    pk = jnp.stack(slabs, axis=0).reshape(k, k, n, cin, oh, ow)
    pk = pk.transpose(2, 4, 5, 3, 0, 1)                  # (N, OH, OW, Cin, KH, KW)
    return pk.reshape(n, oh * ow, cin * k * k), oh, ow


@functools.partial(jax.jit,
                   static_argnames=("kernel_size", "stride", "padding", "p_tile"))
def down_forward_nhwc(x, weight, *, kernel_size, stride, padding, p_tile=512):
    """Fused Conv2d + InstanceNorm2d + ReLU; channels-last output (N, OH, OW, Cout)."""
    n, cin, _, _ = x.shape
    cout = weight.shape[0]
    k = kernel_size

    patches, oh, ow = _im2col(x, k, stride, padding)      # (N, P, F) f32
    p_dim = oh * ow
    f_dim = cin * k * k

    # Lane-dense padding: F and Cout to multiples of 128, P to a multiple of TP.
    f_pad = _round_up(f_dim, 128)
    c_pad = _round_up(cout, 128)
    tp = p_tile if p_dim >= p_tile else _round_up(p_dim, 8)
    p_pad = _round_up(p_dim, tp)
    n_pt = p_pad // tp

    patches = jnp.pad(patches, ((0, 0), (0, p_pad - p_dim), (0, f_pad - f_dim)))
    patches = patches.astype(jnp.bfloat16)                # bf16 HBM stream
    w2d = weight.reshape(cout, f_dim).T                   # (F, Cout)
    w2d = jnp.pad(w2d, ((0, f_pad - f_dim), (0, c_pad - cout))).astype(jnp.bfloat16)

    # Explicit VMEM budget: 2x bf16 patch tiles + weights + f32 accumulator +
    # resident output block + stats, with headroom; fits v5e/v6e/v7x scoped VMEM.
    est = (2 * tp * f_pad * 2 + 2 * f_pad * c_pad * 2
           + 3 * p_pad * c_pad * 4 + 4 * c_pad * 4)
    vmem_limit = int(min(48 * 1024 * 1024, max(32 * 1024 * 1024, 2 * est)))

    kernel = functools.partial(_down_kernel, tp=tp, inv_p=1.0 / float(p_dim))

    out = pl.pallas_call(
        kernel,
        out_shape=jax.ShapeDtypeStruct((n, p_pad, c_pad), jnp.float32),
        grid_spec=pltpu.PrefetchScalarGridSpec(
            num_scalar_prefetch=0,
            grid=(n, n_pt),                               # reduction (P) axis last
            in_specs=[
                pl.BlockSpec((pl.Squeezed(), tp, f_pad), lambda i, j: (i, j, 0)),
                pl.BlockSpec((f_pad, c_pad), lambda i, j: (0, 0)),
            ],
            out_specs=pl.BlockSpec((pl.Squeezed(), p_pad, c_pad),
                                   lambda i, j: (i, 0, 0)),
            scratch_shapes=[
                pltpu.VMEM((p_pad, c_pad), jnp.float32),   # conv output accumulator
                pltpu.VMEM((1, c_pad), jnp.float32),       # per-channel sum
                pltpu.VMEM((1, c_pad), jnp.float32),       # per-channel sum of squares
            ],
        ),
        compiler_params=pltpu.CompilerParams(
            # N is "parallel" (megacore split on v7x); the P-tile axis carries
            # the instance-norm reduction, so it must be "arbitrary".
            dimension_semantics=("parallel", "arbitrary"),
            vmem_limit_bytes=vmem_limit,
        ),
    )(patches, w2d)

    return out[:, :p_dim, :cout].reshape(n, oh, ow, cout)  # drop padding, NHWC


@functools.partial(jax.jit, static_argnames=("kernel_size", "stride", "padding"))
def down_forward(x, weight, bias, *, kernel_size, stride, padding):
    """PyTorch-layout entry point: x (N,Cin,H,W) -> (N,Cout,OH,OW).

    `bias` is accepted for parity with nn.Conv2d but is mathematically cancelled
    by InstanceNorm's mean subtraction, so it is unused.
    """
    del bias
    y = down_forward_nhwc(x, weight, kernel_size=kernel_size, stride=stride,
                          padding=padding)
    # NCHW transpose only for PyTorch parity; when chaining StarGAN blocks,
    # call down_forward_nhwc directly and stay channels-last.
    return y.transpose(0, 3, 1, 2)


if __name__ == "__main__":
    # down(dim_in=4, dim_out=8, kernel_size=4, stride=2, padding=1)
    N, CIN, H, W = 2, 4, 16, 16
    COUT, K, S, P = 8, 4, 2, 1

    key = jax.random.PRNGKey(0)
    kx, kw, kb = jax.random.split(key, 3)
    x = jax.random.normal(kx, (N, CIN, H, W), dtype=jnp.float32)
    fan_in = CIN * K * K
    bound = 1.0 / (fan_in ** 0.5)
    weight = jax.random.uniform(kw, (COUT, CIN, K, K), jnp.float32, -bound, bound)
    bias = jax.random.uniform(kb, (COUT,), jnp.float32, -bound, bound)

    y = down_forward(x, weight, bias, kernel_size=K, stride=S, padding=P)
    jax.block_until_ready(y)

    OH = (H + 2 * P - K) // S + 1
    OW = (W + 2 * P - K) // S + 1
    assert y.shape == (N, COUT, OH, OW)

    # Reference: f32 conv + InstanceNorm2d(affine=False) + ReLU.
    y_conv = jax.lax.conv_general_dilated(
        x, weight, window_strides=(S, S), padding=[(P, P), (P, P)],
        dimension_numbers=("NCHW", "OIHW", "NCHW")) + bias[None, :, None, None]
    mean = y_conv.mean(axis=(2, 3), keepdims=True)
    var = y_conv.var(axis=(2, 3), keepdims=True)
    y_ref = jnp.maximum((y_conv - mean) * jax.lax.rsqrt(var + _EPS), 0.0)
    err = float(jnp.max(jnp.abs(y - y_ref)))
    assert err < 0.1, f"max abs err {err}"

    print("KERNEL_OK")
</pallas_src>

<mosaic_0001>
module attributes {stable_mosaic.version = 11 : i64} {
  func.func @_down_kernel(%arg0: i32, %arg1: i32, %arg2: memref<1x64x128xbf16, #tpu.memory_space<vmem>>, %arg3: memref<128x128xbf16, #tpu.memory_space<vmem>>, %arg4: memref<1x64x128xf32, #tpu.memory_space<vmem>>, %arg5: memref<64x128xf32, #tpu.memory_space<vmem>>, %arg6: memref<1x128xf32, #tpu.memory_space<vmem>>, %arg7: memref<1x128xf32, #tpu.memory_space<vmem>>) attributes {dimension_semantics = [#tpu.dimension_semantics<parallel>, #tpu.dimension_semantics<arbitrary>], iteration_bounds = array<i64: 2, 1>, scalar_prefetch = 0 : i64, scratch_operands = 3 : i64, tpu.core_type = #tpu.core_type<tc>, window_params = [{transform_indices = @transform_0, window_bounds = array<i64: 1, 64, 128>}, {pipeline_mode = #tpu.pipeline_mode<synchronous>, transform_indices = @transform_1, window_bounds = array<i64: 128, 128>}, {transform_indices = @transform_2, window_bounds = array<i64: 1, 64, 128>}]} {
    %c0_i32 = arith.constant 0 : i32
    %0 = arith.cmpi eq, %arg1, %c0_i32 : i32
    %1 = arith.extui %0 : i1 to i32
    %c0_i32_0 = arith.constant 0 : i32
    %2 = arith.cmpi ne, %1, %c0_i32_0 : i32
    scf.if %2 {
      %cst_18 = arith.constant 0.000000e+00 : f32
      %25 = vector.broadcast %cst_18 : f32 to vector<1x128xf32>
      %c0_19 = arith.constant 0 : index
      %c0_20 = arith.constant 0 : index
      %26 = vector.load %arg6[%c0_19, %c0_20] : memref<1x128xf32, #tpu.memory_space<vmem>>, vector<1x128xf32>
      tpu.vector_store %arg6[%c0_19, %c0_20], %25 {strides = array<i32>} : memref<1x128xf32, #tpu.memory_space<vmem>>, vector<1x128xf32>,
      %cst_21 = arith.constant 0.000000e+00 : f32
      %27 = vector.broadcast %cst_21 : f32 to vector<1x128xf32>
      %c0_22 = arith.constant 0 : index
      %c0_23 = arith.constant 0 : index
      %28 = vector.load %arg7[%c0_22, %c0_23] : memref<1x128xf32, #tpu.memory_space<vmem>>, vector<1x128xf32>
      tpu.vector_store %arg7[%c0_22, %c0_23], %27 {strides = array<i32>} : memref<1x128xf32, #tpu.memory_space<vmem>>, vector<1x128xf32>,
    } else {
    }
    %c0 = arith.constant 0 : index
    %c0_1 = arith.constant 0 : index
    %c0_2 = arith.constant 0 : index
    %3 = vector.load %arg2[%c0, %c0_1, %c0_2] : memref<1x64x128xbf16, #tpu.memory_space<vmem>>, vector<1x64x128xbf16>
    %4 = vector.shape_cast %3 : vector<1x64x128xbf16> to vector<64x128xbf16>
    %c0_3 = arith.constant 0 : index
    %c0_4 = arith.constant 0 : index
    %5 = vector.load %arg3[%c0_3, %c0_4] : memref<128x128xbf16, #tpu.memory_space<vmem>>, vector<128x128xbf16>
    %cst = arith.constant dense<0.000000e+00> : vector<64x128xf32>
    %6 = tpu.matmul %4, %5, %cst {dimension_numbers = #tpu.dot_dimension_numbers<[1], [0], [0], [1], [0, 0, 1, 1], [], []>} : vector<64x128xbf16>, vector<128x128xbf16>, vector<64x128xf32> -> vector<64x128xf32>
    %c64_i32 = arith.constant 64 : i32
    %7 = arith.muli %arg1, %c64_i32 : i32
    %8 = tpu.assume_multiple %7, 64 : i32
    %9 = arith.index_cast %8 : i32 to index
    %c0_5 = arith.constant 0 : index
    %10 = vector.load %arg5[%9, %c0_5] : memref<64x128xf32, #tpu.memory_space<vmem>>, vector<64x128xf32>
    tpu.vector_store %arg5[%9, %c0_5], %6 {strides = array<i32>} : memref<64x128xf32, #tpu.memory_space<vmem>>, vector<64x128xf32>,
    %c0_6 = arith.constant 0 : index
    %c0_7 = arith.constant 0 : index
    %11 = vector.load %arg6[%c0_6, %c0_7] : memref<1x128xf32, #tpu.memory_space<vmem>>, vector<1x128xf32>
    %cst_8 = arith.constant dense<0.000000e+00> : vector<128xf32>
    %12 = vector.multi_reduction <add>, %6, %cst_8 [0] : vector<64x128xf32> to vector<128xf32>
    %13 = vector.shape_cast %12 : vector<128xf32> to vector<1x128xf32>
    %14 = arith.addf %11, %13 : vector<1x128xf32>
    %c0_9 = arith.constant 0 : index
    %c0_10 = arith.constant 0 : index
    %15 = vector.load %arg6[%c0_9, %c0_10] : memref<1x128xf32, #tpu.memory_space<vmem>>, vector<1x128xf32>
    tpu.vector_store %arg6[%c0_9, %c0_10], %14 {strides = array<i32>} : memref<1x128xf32, #tpu.memory_space<vmem>>, vector<1x128xf32>,
    %c0_11 = arith.constant 0 : index
    %c0_12 = arith.constant 0 : index
    %16 = vector.load %arg7[%c0_11, %c0_12] : memref<1x128xf32, #tpu.memory_space<vmem>>, vector<1x128xf32>
    %17 = arith.mulf %6, %6 : vector<64x128xf32>
    %cst_13 = arith.constant dense<0.000000e+00> : vector<128xf32>
    %18 = vector.multi_reduction <add>, %17, %cst_13 [0] : vector<64x128xf32> to vector<128xf32>
    %19 = vector.shape_cast %18 : vector<128xf32> to vector<1x128xf32>
    %20 = arith.addf %16, %19 : vector<1x128xf32>
    %c0_14 = arith.constant 0 : index
    %c0_15 = arith.constant 0 : index
    %21 = vector.load %arg7[%c0_14, %c0_15] : memref<1x128xf32, #tpu.memory_space<vmem>>, vector<1x128xf32>
    tpu.vector_store %arg7[%c0_14, %c0_15], %20 {strides = array<i32>} : memref<1x128xf32, #tpu.memory_space<vmem>>, vector<1x128xf32>,
    %c0_i32_16 = arith.constant 0 : i32
    %22 = arith.cmpi eq, %arg1, %c0_i32_16 : i32
    %23 = arith.extui %22 : i1 to i32
    %c0_i32_17 = arith.constant 0 : i32
    %24 = arith.cmpi ne, %23, %c0_i32_17 : i32
    scf.if %24 {
      %c0_18 = arith.constant 0 : index
      %c0_19 = arith.constant 0 : index
      %25 = vector.load %arg6[%c0_18, %c0_19] : memref<1x128xf32, #tpu.memory_space<vmem>>, vector<1x128xf32>
      %cst_20 = arith.constant 1.562500e-02 : f32
      %26 = vector.broadcast %cst_20 : f32 to vector<1x128xf32>
      %27 = arith.mulf %25, %26 : vector<1x128xf32>
      %c0_21 = arith.constant 0 : index
      %c0_22 = arith.constant 0 : index
      %28 = vector.load %arg7[%c0_21, %c0_22] : memref<1x128xf32, #tpu.memory_space<vmem>>, vector<1x128xf32>
      %cst_23 = arith.constant 1.562500e-02 : f32
      %29 = vector.broadcast %cst_23 : f32 to vector<1x128xf32>
      %30 = arith.mulf %28, %29 : vector<1x128xf32>
      %31 = arith.mulf %27, %27 : vector<1x128xf32>
      %32 = arith.subf %30, %31 : vector<1x128xf32>
      %cst_24 = arith.constant 0.000000e+00 : f32
      %33 = vector.broadcast %cst_24 : f32 to vector<1x128xf32>
      %34 = arith.maximumf %32, %33 : vector<1x128xf32>
      %cst_25 = arith.constant 9.99999974E-6 : f32
      %35 = vector.broadcast %cst_25 : f32 to vector<1x128xf32>
      %36 = arith.addf %34, %35 : vector<1x128xf32>
      %37 = math.rsqrt %36 : vector<1x128xf32>
      %c0_26 = arith.constant 0 : index
      %c0_27 = arith.constant 0 : index
      %38 = vector.load %arg5[%c0_26, %c0_27] : memref<64x128xf32, #tpu.memory_space<vmem>>, vector<64x128xf32>
      %39 = vector.broadcast %27 : vector<1x128xf32> to vector<64x128xf32>
      %40 = arith.subf %38, %39 : vector<64x128xf32>
      %41 = vector.broadcast %37 : vector<1x128xf32> to vector<64x128xf32>
      %42 = arith.mulf %40, %41 : vector<64x128xf32>
      %cst_28 = arith.constant 0.000000e+00 : f32
      %43 = vector.broadcast %cst_28 : f32 to vector<64x128xf32>
      %44 = arith.maximumf %42, %43 : vector<64x128xf32>
      %c0_29 = arith.constant 0 : index
      %c0_30 = arith.constant 0 : index
      %c0_31 = arith.constant 0 : index
      %45 = vector.load %arg4[%c0_29, %c0_30, %c0_31] : memref<1x64x128xf32, #tpu.memory_space<vmem>>, vector<1x64x128xf32>
      %46 = vector.shape_cast %45 : vector<1x64x128xf32> to vector<64x128xf32>
      %47 = vector.shape_cast %44 : vector<64x128xf32> to vector<1x64x128xf32>
      tpu.vector_store %arg4[%c0_29, %c0_30, %c0_31], %47 {strides = array<i32>} : memref<1x64x128xf32, #tpu.memory_space<vmem>>, vector<1x64x128xf32>,
    } else {
    }
    return
  }
  func.func @transform_0(%arg0: i32, %arg1: i32) -> (i32, i32, i32) {
    %c0_i32 = arith.constant 0 : i32
    %c0_i32_0 = arith.constant 0 : i32
    return %arg0, %arg1, %c0_i32 : i32, i32, i32
  }
  func.func @transform_1(%arg0: i32, %arg1: i32) -> (i32, i32) {
    %c0_i32 = arith.constant 0 : i32
    %c0_i32_0 = arith.constant 0 : i32
    %c0_i32_1 = arith.constant 0 : i32
    return %c0_i32, %c0_i32_0 : i32, i32
  }
  func.func @transform_2(%arg0: i32, %arg1: i32) -> (i32, i32, i32) {
    %c0_i32 = arith.constant 0 : i32
    %c0_i32_0 = arith.constant 0 : i32
    %c0_i32_1 = arith.constant 0 : i32
    return %arg0, %c0_i32, %c0_i32_0 : i32, i32, i32
  }
}

</mosaic_0001>

<llo_original>
// kernel: down_forward_nhwc.1
$region0: #{down_forward_nhwc.1}
  #allocation0 [shape = 'u32[]', space=smem, size = 0x4, offset = 0x4, fixed_abs, tag = 'smem constant byte address 0x4 - core index']
  #allocation1 [shape = 'u32[72,128]{1,0:T(1,128)}', space=vmem, size = 0x9000, scoped, tag = 'internal scratch']
  #allocation2 [shape = 'f32[64,128]{1,0:T(8,128)}', space=vmem, size = 0x8000, scoped, tag = 'scratch operand']
  #allocation3 [shape = 'f32[1,128]{1,0:T(1,128)}', space=vmem, size = 0x200, scoped, tag = 'scratch operand']
  #allocation4 [shape = 'f32[1,128]{1,0:T(1,128)}', space=vmem, size = 0x200, scoped, tag = 'scratch operand']
  %s0 = inlined_call_operand.vmem [shape: bf16[2,64,128], index: 0, kind: input, shape index: {}]
  %s1 = inlined_call_operand.vmem [shape: bf16[128,128], index: 1, kind: input, shape index: {}]
  %s2 = inlined_call_operand.vmem [shape: f32[2,64,128], index: 2, kind: output, shape index: {}]
  %s3 = sld [smem:[#allocation0]]
  $region49: #{down_forward_nhwc.1} parent=0
    _
  %s5 = ssub.s32 1, %s3
  %s6 = scalar_select 0, %s5, %s3
  loop: start=0, step=1, limit=4
  $region2: #{down_forward_nhwc.1} parent=0 // loop_pre_header
    _
  $region3: #{down_forward_nhwc.1} parent=0 // loop_header
    %s8 = sphi 0, %s12
    %p9 = scmp.ge.s32.totalorder %s8, 4
    %s15 = sphi 0, %s27
    %s16 = sphi 0, %s23
    %s17 = sphi 0, %s15
    %s18 = sphi 0, %s16
    %s19 = sphi 0, %s17
    %s20 = sphi 0, %s18
    %s32 = sphi 0, %s34
    %s35 = sphi 0, %s32
    %s36 = sphi 0, %s35
    %s52 = sphi 0, %s36
    %s56 = sphi 0, %s56
    %s58 = sphi 0, %s56
    %s59 = sphi 0, %s58
    %s73 = sphi 0, %s59
    %s79 = sphi 0, %s81
    %s82 = sphi 0, %s79
    %s83 = sphi 0, %s82
    %s99 = sphi 0, %s83
  $region4: #{down_forward_nhwc.1} parent=0 // loop_header_branch
    %11 = sbr.rel (%p9) target = $region8
  $region5: #{down_forward_nhwc.1} parent=0 // loop_body
    %s13 = ssub.s32 %s8, 1
    %s14 = ssub.s32 %s8, 2
    %s21 = sadd.s32 1, %s16
    %p22 = scmp.ge.s32.totalorder %s21, 1
    %s23 = scalar_select %p22, 0, %s21
    %s24 = sadd.s32 1, %s15
    %s25 = scalar_select %p22, %s24, %s15
    %p26 = scmp.ge.s32.totalorder %s25, 2
    %s27 = scalar_select %p26, 0, %s25
    %s28 = ssub.s32 %s15, %s27
    %s29 = ssub.s32 %s16, %s23
    %s30 = sor.u32 %s28, %s29
    %p31 = scmp.eq.s32.totalorder %s30, 0
    %s33 = sadd.s32 %s32, 1
    %s34 = scalar_select %p31, %s32, %s33
    %p37 = pneg %p31
    %p38 = scmp.eq.s32.totalorder %s8, 1
    %p39 = por %p37, %p38
    %p40 = scmp.ne.s32.totalorder %s32, %s35
    %p41 = scmp.eq.s32.totalorder %s8, 0
    %p42 = por %p40, %p41
    %p43 = scmp.ne.s32.totalorder %s32, %s35
    %p44 = scmp.eq.s32.totalorder %s13, 1
    %p45 = por %p43, %p44
    %p46 = scmp.ne.s32.totalorder %s35, %s36
    %p47 = scmp.eq.s32.totalorder %s13, 0
    %p48 = por %p46, %p47
    %p49 = scmp.ne.s32.totalorder %s35, %s36
    %p50 = scmp.eq.s32.totalorder %s14, 1
    %p51 = por %p49, %p50
    %p53 = scmp.ne.s32.totalorder %s36, %s52
    %p54 = scmp.eq.s32.totalorder %s14, 0
    %p55 = por %p53, %p54
    %s57 = sadd.s32 %s56, 1
    %p60 = scmp.eq.s32.totalorder %s8, 1
    %p61 = scmp.ne.s32.totalorder %s56, %s58
    %p62 = scmp.eq.s32.totalorder %s8, 0
    %p63 = por %p61, %p62
    %p64 = scmp.ne.s32.totalorder %s56, %s58
    %p65 = scmp.eq.s32.totalorder %s13, 1
    %p66 = por %p64, %p65
    %p67 = scmp.ne.s32.totalorder %s58, %s59
    %p68 = scmp.eq.s32.totalorder %s13, 0
    %p69 = por %p67, %p68
    %p70 = scmp.ne.s32.totalorder %s58, %s59
    %p71 = scmp.eq.s32.totalorder %s14, 1
    %p72 = por %p70, %p71
    %p74 = scmp.ne.s32.totalorder %s59, %s73
    %p75 = scmp.eq.s32.totalorder %s14, 0
    %p76 = por %p74, %p75
    %s77 = ssub.s32 %s15, %s27
    %p78 = scmp.eq.s32.totalorder %s77, 0
    %s80 = sadd.s32 %s79, 1
    %s81 = scalar_select %p78, %s79, %s80
    %p84 = pneg %p78
    %p85 = scmp.eq.s32.totalorder %s8, 1
    %p86 = por %p84, %p85
    %p87 = scmp.ne.s32.totalorder %s79, %s82
    %p88 = scmp.eq.s32.totalorder %s8, 0
    %p89 = por %p87, %p88
    %p90 = scmp.ne.s32.totalorder %s79, %s82
    %p91 = scmp.eq.s32.totalorder %s13, 1
    %p92 = por %p90, %p91
    %p93 = scmp.ne.s32.totalorder %s82, %s83
    %p94 = scmp.eq.s32.totalorder %s13, 0
    %p95 = por %p93, %p94
    %p96 = scmp.ne.s32.totalorder %s82, %s83
    %p97 = scmp.eq.s32.totalorder %s14, 1
    %p98 = por %p96, %p97
    %p100 = scmp.ne.s32.totalorder %s83, %s99
    %p101 = scmp.eq.s32.totalorder %s14, 0
    %p102 = por %p100, %p101
    %p103 = scmp.le.s32.totalorder 1, %s8
    %p104 = scmp.lt.s32.totalorder %s8, 3
    %p105 = pnand %p103, %p104
    %p106 = pneg %p105
    // Predicated region
    $region9: #{down_forward_nhwc.1} parent=5 // pred_check
      _
    $region10: #{down_forward_nhwc.1} parent=5 // pred_check_branch
      %108 = sbr.rel (%p105) target = $region12
    $region11: #{down_forward_nhwc.1} parent=5 // pred_region
      %s109 = ssub.s32 %s8, 1
      // Predicated region
      $region13: #{down_forward_nhwc.1} parent=11 // pred_check
        %p110 = pneg %p69
      $region14: #{down_forward_nhwc.1} parent=11 // pred_check_branch
        %112 = sbr.rel (%p110) target = $region16
      $region15: #{down_forward_nhwc.1} parent=11 // pred_region
        _
      $region16: #{down_forward_nhwc.1} parent=11 // pred_fallthru
        _
    $region12: #{down_forward_nhwc.1} parent=5 // pred_fallthru
      _
    %p113 = scmp.lt.s32.totalorder %s8, 2
    // Predicated region
    $region17: #{down_forward_nhwc.1} parent=5 // pred_check
      %p114 = pneg %p113
    $region18: #{down_forward_nhwc.1} parent=5 // pred_check_branch
      %116 = sbr.rel (%p114) target = $region20
    $region19: #{down_forward_nhwc.1} parent=5 // pred_region
      // Predicated region
      $region21: #{down_forward_nhwc.1} parent=19 // pred_check
        %p117 = pneg %p42
      $region22: #{down_forward_nhwc.1} parent=19 // pred_check_branch
        %119 = sbr.rel (%p117) target = $region24
      $region23: #{down_forward_nhwc.1} parent=19 // pred_region
        %s120 = smul.u32 8, %s16
        %p121 = scmp.lt.s32.totalorder %s15, 1
        %s122 = scalar_select %p121, %s15, 1
        %p123 = scmp.lt.s32.totalorder %s120, 7
        %s124 = scalar_select %p123, %s120, 7
        %s125 = smul.addr %s122, 8
        %s126 = sadd.s32 %s124, %s125
        %s127 = smul.addr %s126, 4
        %s128 = scalar_lea.vmem %s0, %s127
        %s129 = smul.u32 8, %s16
      $region24: #{down_forward_nhwc.1} parent=19 // pred_fallthru
        _
    $region20: #{down_forward_nhwc.1} parent=5 // pred_fallthru
      _
    %p130 = scmp.le.s32.totalorder 1, %s8
    %p131 = scmp.lt.s32.totalorder %s8, 3
    %p132 = pnand %p130, %p131
    %p133 = pneg %p132
    // Predicated region
    $region25: #{down_forward_nhwc.1} parent=5 // pred_check
      _
    $region26: #{down_forward_nhwc.1} parent=5 // pred_check_branch
      %135 = sbr.rel (%p132) target = $region28
    $region27: #{down_forward_nhwc.1} parent=5 // pred_region
      %s136 = ssub.s32 %s8, 1
      %s137 = smul.u32 8, %s18
      %p138 = scmp.lt.s32.totalorder %s17, 1
      %s139 = scalar_select %p138, %s17, 1
      %p140 = scmp.lt.s32.totalorder %s137, 7
      %s141 = scalar_select %p140, %s137, 7
      %s142 = smul.addr %s139, 8
      %s143 = sadd.s32 %s141, %s142
      %s144 = smul.addr %s143, 4
      %s145 = scalar_lea.vmem %s0, %s144
      %p146 = pneg %p48
      %p147 = pneg %p45
      %p148 = pneg %p69
      %p149 = pneg %p66
      %p150 = pneg %p95
      %p151 = pneg %p92
      %p152 = scmp.lt.s32.totalorder %s17, 1
      %s153 = scalar_select %p152, %s17, 1
      %s154 = smul.addr %s153, 8
      %s155 = smul.addr %s154, 8
      %s156 = scalar_lea.vmem %s2, %s155
      %s157 = smul.u32 8, %s18
      %p158 = scmp.lt.s32.totalorder %s17, 1
      %s159 = scalar_select %p158, %s17, 1
      %p160 = scmp.lt.s32.totalorder %s157, 7
      %s161 = scalar_select %p160, %s157, 7
      %s162 = smul.addr %s159, 8
      %s163 = sadd.s32 %s161, %s162
      %s164 = smul.addr %s163, 4
      %s165 = scalar_lea.vmem %s0, %s164
      %s166 = smul.u32 8, %s18
      %p167 = scmp.lt.s32.totalorder %s17, 1
      %s168 = scalar_select %p167, %s17, 1
      %s169 = smul.addr %s168, 8
      %s170 = smul.addr %s169, 8
      %s171 = scalar_lea.vmem %s2, %s170
      %p172 = scmp.eq.s32.totalorder %s18, 0
      // Predicated region
      $region29: #{down_forward_nhwc.1} parent=27 // pred_check
        %p173 = pneg %p172
      $region30: #{down_forward_nhwc.1} parent=27 // pred_check_branch
        %175 = sbr.rel (%p173) target = $region32
      $region31: #{down_forward_nhwc.1} parent=27 // pred_region
        %176 = vst [vmem:[#allocation3] sm:$0x1] 0.0
        %177 = vst [vmem:[#allocation4] sm:$0x1] 0.0
      $region32: #{down_forward_nhwc.1} parent=27 // pred_fallthru
        _
      %v178 = vld [vmem:[%s165] sm:$0xf]
      %v179 = vld [vmem:[%s165 + $0x4] sm:$0xf]
      %v180 = vld [vmem:[%s165 + $0x8] sm:$0xf]
      %v181 = vld [vmem:[%s165 + $0xc] sm:$0xf]
      %v182 = vld [vmem:[%s165 + $0x10] sm:$0xf]
      %v183 = vld [vmem:[%s165 + $0x14] sm:$0xf]
      %v184 = vld [vmem:[%s165 + $0x18] sm:$0xf]
      %v185 = vld [vmem:[%s165 + $0x1c] sm:$0xf]
      %v186 = vld [vmem:[%s1] sm:$0xf]
      %v187 = vld [vmem:[%s1 + $0x4] sm:$0xf]
      %v188 = vld [vmem:[%s1 + $0x8] sm:$0xf]
      %v189 = vld [vmem:[%s1 + $0xc] sm:$0xf]
      %v190 = vld [vmem:[%s1 + $0x10] sm:$0xf]
      %v191 = vld [vmem:[%s1 + $0x14] sm:$0xf]
      %v192 = vld [vmem:[%s1 + $0x18] sm:$0xf]
      %v193 = vld [vmem:[%s1 + $0x1c] sm:$0xf]
      %v194 = vld [vmem:[%s1 + $0x20] sm:$0xf]
      %v195 = vld [vmem:[%s1 + $0x24] sm:$0xf]
      %v196 = vld [vmem:[%s1 + $0x28] sm:$0xf]
      %v197 = vld [vmem:[%s1 + $0x2c] sm:$0xf]
      %v198 = vld [vmem:[%s1 + $0x30] sm:$0xf]
      %v199 = vld [vmem:[%s1 + $0x34] sm:$0xf]
      %v200 = vld [vmem:[%s1 + $0x38] sm:$0xf]
      %v201 = vld [vmem:[%s1 + $0x3c] sm:$0xf]
      %v210 = vunpack.c.l.b16 %v178
      %v211 = vunpack.c.l.b16 %v179
      %v212 = vunpack.c.l.b16 %v180
      %v213 = vunpack.c.l.b16 %v181
      %v214 = vunpack.c.l.b16 %v182
      %v215 = vunpack.c.l.b16 %v183
      %v216 = vunpack.c.l.b16 %v184
      %v217 = vunpack.c.l.b16 %v185
      %v218 = vpack.c.b16 %v211, %v210
      %v219 = vpack.c.b16 %v213, %v212
      %v220 = vpack.c.b16 %v215, %v214
      %v221 = vpack.c.b16 %v217, %v216
      %v242 = vunpack.c.l.b16 %v186
      %v243 = vunpack.c.l.b16 %v187
      %v244 = vunpack.c.l.b16 %v188
      %v245 = vunpack.c.l.b16 %v189
      %v246 = vunpack.c.l.b16 %v190
      %v247 = vunpack.c.l.b16 %v191
      %v248 = vunpack.c.l.b16 %v192
      %v249 = vunpack.c.l.b16 %v193
      %v250 = vunpack.c.l.b16 %v194
      %v251 = vunpack.c.l.b16 %v195
      %v252 = vunpack.c.l.b16 %v196
      %v253 = vunpack.c.l.b16 %v197
      %v254 = vunpack.c.l.b16 %v198
      %v255 = vunpack.c.l.b16 %v199
      %v256 = vunpack.c.l.b16 %v200
      %v257 = vunpack.c.l.b16 %v201
      %v258 = vpack.c.b16 %v243, %v242
      %v259 = vpack.c.b16 %v245, %v244
      %v260 = vpack.c.b16 %v247, %v246
      %v261 = vpack.c.b16 %v249, %v248
      %v262 = vpack.c.b16 %v251, %v250
      %v263 = vpack.c.b16 %v253, %v252
      %v264 = vpack.c.b16 %v255, %v254
      %v265 = vpack.c.b16 %v257, %v256
      %274 = vmatpush.bf16.msra.mxu0 %v265
      %275 = vmatpush.bf16.msra.mxu0 %v264
      %276 = vmatpush.bf16.msra.mxu0 %v263
      %277 = vmatpush.bf16.msra.mxu0 %v262
      %278 = vmatpush.bf16.msra.mxu0 %v261
      %279 = vmatpush.bf16.msra.mxu0 %v260
      %280 = vmatpush.bf16.msra.mxu0 %v259
      %281 = vmatpush.bf16.msra.mxu0 %v258
      %282 = vmatmul.bf16.gmra.mxu0 %v218
      %v283 = vpop.f32.mrf.mxu0
      %v284 = vadd.f32 0.0, %v283
      %v285 = vpop.f32.mrf.mxu0
      %v286 = vadd.f32 0.0, %v285
      %287 = vmatmul.bf16.gmra.mxu0 %v219
      %v288 = vpop.f32.mrf.mxu0
      %v289 = vadd.f32 0.0, %v288
      %v290 = vpop.f32.mrf.mxu0
      %v291 = vadd.f32 0.0, %v290
      %292 = vmatmul.bf16.gmra.mxu0 %v220
      %v293 = vpop.f32.mrf.mxu0
      %v294 = vadd.f32 0.0, %v293
      %v295 = vpop.f32.mrf.mxu0
      %v296 = vadd.f32 0.0, %v295
      %297 = vmatmul.bf16.gmra.mxu0 %v221
      %v298 = vpop.f32.mrf.mxu0
      %v299 = vadd.f32 0.0, %v298
      %v300 = vpop.f32.mrf.mxu0
      %v301 = vadd.f32 0.0, %v300
      %302 = vdwg.mxu0
      %s303 = smul.u32 %s18, 64
      %s304 = scalar_lea.vmem [#allocation2], %s303
      %305 = vst [vmem:[%s304] sm:$0xff] %v284
      %306 = vst [vmem:[%s304 + $0x8] sm:$0xff] %v286
      %307 = vst [vmem:[%s304 + $0x10] sm:$0xff] %v289
      %308 = vst [vmem:[%s304 + $0x18] sm:$0xff] %v291
      %309 = vst [vmem:[%s304 + $0x20] sm:$0xff] %v294
      %310 = vst [vmem:[%s304 + $0x28] sm:$0xff] %v296
      %311 = vst [vmem:[%s304 + $0x30] sm:$0xff] %v299
      %312 = vst [vmem:[%s304 + $0x38] sm:$0xff] %v301
      %v313 = vld [vmem:[#allocation3] sm:$0x1]
      %v314 = vadd.f32 %v284, %v286
      %v315 = vadd.f32 %v314, %v289
      %v316 = vadd.f32 %v315, %v291
      %v317 = vadd.f32 %v316, %v294
      %v318 = vadd.f32 %v317, %v296
      %v319 = vadd.f32 %v318, %v299
      %v320 = vadd.f32 %v319, %v301
      %v321 = vrot.slane %v320, 4
      %v322 = vadd.f32 %v320, %v321
      %v323 = vrot.slane %v322, 2
      %v324 = vadd.f32 %v322, %v323
      %v325 = vrot.slane %v324, 1
      %v326 = vadd.f32 %v324, %v325
      %v327 = vadd.f32 %v313, %v326
      %328 = vst [vmem:[#allocation3] sm:$0x1] %v327
      %v329 = vld [vmem:[#allocation4] sm:$0x1]
      %v330 = vmul.f32 %v284, %v284
      %v331 = vmul.f32 %v286, %v286
      %v332 = vmul.f32 %v289, %v289
      %v333 = vmul.f32 %v291, %v291
      %v334 = vmul.f32 %v294, %v294
      %v335 = vmul.f32 %v296, %v296
      %v336 = vmul.f32 %v299, %v299
      %v337 = vmul.f32 %v301, %v301
      %v338 = vadd.f32 %v330, %v331
      %v339 = vadd.f32 %v338, %v332
      %v340 = vadd.f32 %v339, %v333
      %v341 = vadd.f32 %v340, %v334
      %v342 = vadd.f32 %v341, %v335
      %v343 = vadd.f32 %v342, %v336
      %v344 = vadd.f32 %v343, %v337
      %v345 = vrot.slane %v344, 4
      %v346 = vadd.f32 %v344, %v345
      %v347 = vrot.slane %v346, 2
      %v348 = vadd.f32 %v346, %v347
      %v349 = vrot.slane %v348, 1
      %v350 = vadd.f32 %v348, %v349
      %v351 = vadd.f32 %v329, %v350
      %352 = vst [vmem:[#allocation4] sm:$0x1] %v351
      // Predicated region
      $region33: #{down_forward_nhwc.1} parent=27 // pred_check
        %p353 = pneg %p172
      $region34: #{down_forward_nhwc.1} parent=27 // pred_check_branch
        %355 = sbr.rel (%p353) target = $region36
      $region35: #{down_forward_nhwc.1} parent=27 // pred_region
        %v356 = vld [vmem:[#allocation3] sm:$0x1]
        %v357 = vmul.f32 %v356, 0.015625
        %v358 = vld [vmem:[#allocation4] sm:$0x1]
        %v359 = vmul.f32 %v358, 0.015625
        %v360 = vmul.f32 %v357, %v357
        %v361 = vsub.f32 %v359, %v360
        %v362 = vmax.f32 %v361, 0.0
        %v363 = vadd.f32 %v362, 1e-05
        %v364 = vrsqrt.pop %v363
        %v365 = vmul.f32 %v364, %v363
        %v366 = vmul.f32 %v365, %v364
        %v367 = vmul.f32 0.5, %v366
        %v368 = vsub.f32 1.5, %v367
        %v369 = vmul.f32 %v364, %v368
        %vm370 = vweird.f32 %v363
        %vm371 = vweird.f32 %v364
        %vm372 = vmor %vm370, %vm371
        %v373 = vsel %vm372, %v364, %v369
        %v374 = vld [vmem:[#allocation2] sm:$0xff]
        %v375 = vld [vmem:[#allocation2 + $0x8] sm:$0xff]
        %v376 = vld [vmem:[#allocation2 + $0x10] sm:$0xff]
        %v377 = vld [vmem:[#allocation2 + $0x18] sm:$0xff]
        %v378 = vld [vmem:[#allocation2 + $0x20] sm:$0xff]
        %v379 = vld [vmem:[#allocation2 + $0x28] sm:$0xff]
        %v380 = vld [vmem:[#allocation2 + $0x30] sm:$0xff]
        %v381 = vld [vmem:[#allocation2 + $0x38] sm:$0xff]
        %v383 = vperm.slane %v357, 0
        %v385 = vsub.f32 %v374, %v383
        %v386 = vsub.f32 %v375, %v383
        %v387 = vsub.f32 %v376, %v383
        %v388 = vsub.f32 %v377, %v383
        %v389 = vsub.f32 %v378, %v383
        %v390 = vsub.f32 %v379, %v383
        %v391 = vsub.f32 %v380, %v383
        %v392 = vsub.f32 %v381, %v383
        %v394 = vperm.slane %v373, 0
        %v396 = vmul.f32 %v385, %v394
        %v397 = vmul.f32 %v386, %v394
        %v398 = vmul.f32 %v387, %v394
        %v399 = vmul.f32 %v388, %v394
        %v400 = vmul.f32 %v389, %v394
        %v401 = vmul.f32 %v390, %v394
        %v402 = vmul.f32 %v391, %v394
        %v403 = vmul.f32 %v392, %v394
        %v404 = vmax.f32 %v396, 0.0
        %v405 = vmax.f32 %v397, 0.0
        %v406 = vmax.f32 %v398, 0.0
        %v407 = vmax.f32 %v399, 0.0
        %v408 = vmax.f32 %v400, 0.0
        %v409 = vmax.f32 %v401, 0.0
        %v410 = vmax.f32 %v402, 0.0
        %v411 = vmax.f32 %v403, 0.0
        %412 = vst [vmem:[%s171] sm:$0xff] %v404
        %413 = vst [vmem:[%s171 + $0x8] sm:$0xff] %v405
        %414 = vst [vmem:[%s171 + $0x10] sm:$0xff] %v406
        %415 = vst [vmem:[%s171 + $0x18] sm:$0xff] %v407
        %416 = vst [vmem:[%s171 + $0x20] sm:$0xff] %v408
        %417 = vst [vmem:[%s171 + $0x28] sm:$0xff] %v409
        %418 = vst [vmem:[%s171 + $0x30] sm:$0xff] %v410
        %419 = vst [vmem:[%s171 + $0x38] sm:$0xff] %v411
      $region36: #{down_forward_nhwc.1} parent=27 // pred_fallthru
        _
      %p420 = scmp.lt.s32.totalorder %s17, 1
      %s421 = scalar_select %p420, %s17, 1
      %s422 = smul.addr %s421, 8
      %s423 = smul.addr %s422, 8
      %s424 = scalar_lea.vmem %s2, %s423
      // Predicated region
      $region37: #{down_forward_nhwc.1} parent=27 // pred_check
        %p425 = pneg %p92
      $region38: #{down_forward_nhwc.1} parent=27 // pred_check_branch
        %427 = sbr.rel (%p425) target = $region40
      $region39: #{down_forward_nhwc.1} parent=27 // pred_region
        _
      $region40: #{down_forward_nhwc.1} parent=27 // pred_fallthru
        _
    $region28: #{down_forward_nhwc.1} parent=5 // pred_fallthru
      _
    %p428 = scmp.le.s32.totalorder 2, %s8
    // Predicated region
    $region41: #{down_forward_nhwc.1} parent=5 // pred_check
      %p429 = pneg %p428
    $region42: #{down_forward_nhwc.1} parent=5 // pred_check_branch
      %431 = sbr.rel (%p429) target = $region44
    $region43: #{down_forward_nhwc.1} parent=5 // pred_region
      %s432 = ssub.s32 %s8, 2
      // Predicated region
      $region45: #{down_forward_nhwc.1} parent=43 // pred_check
        %p433 = pneg %p98
      $region46: #{down_forward_nhwc.1} parent=43 // pred_check_branch
        %435 = sbr.rel (%p433) target = $region48
      $region47: #{down_forward_nhwc.1} parent=43 // pred_region
        %p436 = scmp.lt.s32.totalorder %s19, 1
        %s437 = scalar_select %p436, %s19, 1
        %s438 = smul.addr %s437, 8
        %s439 = smul.addr %s438, 8
        %s440 = scalar_lea.vmem %s2, %s439
      $region48: #{down_forward_nhwc.1} parent=43 // pred_fallthru
        _
    $region44: #{down_forward_nhwc.1} parent=5 // pred_fallthru
      _
  $region6: #{down_forward_nhwc.1} parent=0 // loop_footer
    %s12 = sadd.s32 1, %s8
  $region7: #{down_forward_nhwc.1} parent=0 // loop_footer_branch
    %7 = sbr.rel target = $region3
  $region8: #{down_forward_nhwc.1} parent=0 // loop_exit
    _

</llo_original>
